<compile_context>
chip_gen: v6e
topology: v6e:2x2x1
jax: 0.10.0
libtpu: 0.0.40
codegen_flags: <defaults>
</compile_context>

<pallas_src>
import jax
import jax.numpy as jnp
from jax.experimental import pallas as pl
from jax.experimental.pallas import tpu as pltpu


# ----------------------------------------------------------------------------
# Pallas kernel: fc1 -> fc2 -> log_softmax, fused (bf16 MXU, f32 accumulate)
# ----------------------------------------------------------------------------
def _scafnet_kernel(x_ref, w1_ref, b1_ref, w2_ref, b2_ref, o_ref):
    # Cast x to bf16 in-kernel (VPU cast is free under memory slack).
    x = x_ref[...].astype(jnp.bfloat16)
    # fc1: (tm, 784) @ (784, 256) on the MXU, f32 accumulation.
    h = jnp.dot(x, w1_ref[...], preferred_element_type=jnp.float32) + b1_ref[...]
    # fc2: (tm, 256) @ (256, 62), again bf16 in / f32 out.
    z = jnp.dot(h.astype(jnp.bfloat16), w2_ref[...],
                preferred_element_type=jnp.float32) + b2_ref[...]
    # Numerically-stable log_softmax over the class axis (row-wise only).
    m = jnp.max(z, axis=-1, keepdims=True)
    e = jnp.exp(z - m)
    lse = jnp.log(jnp.sum(e, axis=-1, keepdims=True)) + m
    o_ref[...] = (z - lse).astype(o_ref.dtype)


def _round_up(n, m):
    return -(-n // m) * m


def scafnet_forward(params, x, *, tm=1024):
    """x: any shape with 784 trailing elements per row (PyTorch view(-1, 784))."""
    x2d = x.reshape(-1, 784)          # no dtype cast here; cast happens in-kernel
    B = x2d.shape[0]

    # Weights are tiny; one-time bf16 cast for the MXU. Biases stay f32.
    w1 = params['w1'].astype(jnp.bfloat16)                  # (784, 256)
    w2 = params['w2'].astype(jnp.bfloat16)                  # (256, 62)
    b1 = params['b1'].reshape(1, -1).astype(jnp.float32)    # (1, 256)
    b2 = params['b2'].reshape(1, -1).astype(jnp.float32)    # (1, 62)

    K, H = w1.shape
    C = w2.shape[1]

    # Batch tile: multiple of 8 sublanes, at least ceil(B/2) so that B > 8
    # yields >=2 grid steps (megacore on v7x), capped at tm. If a single block
    # covers the whole batch, use the full extent (no 8-divisibility needed).
    half = -(-B // 2)
    tm_eff = min(tm, _round_up(max(half, 1), 8))
    if tm_eff >= B:
        tm_eff = B
    grid = -(-B // tm_eff)            # partial last block allowed; no padding

    x_bytes = B * K * jnp.dtype(x2d.dtype).itemsize
    w_bytes = (w1.size * 2 + w2.size * 2 + b1.size * 4 + b2.size * 4)
    cost = pl.CostEstimate(
        flops=2 * B * (K * H + H * C),
        transcendentals=B * (C + 1),
        bytes_accessed=x_bytes + w_bytes + B * C * 4,
    )

    out = pl.pallas_call(
        _scafnet_kernel,
        out_shape=jax.ShapeDtypeStruct((B, C), jnp.float32),
        grid_spec=pltpu.PrefetchScalarGridSpec(
            num_scalar_prefetch=0,
            grid=(grid,),
            in_specs=[
                pl.BlockSpec((tm_eff, K), lambda i: (i, 0)),   # x tile (native dtype)
                pl.BlockSpec((K, H), lambda i: (0, 0)),        # w1 (resident)
                pl.BlockSpec((1, H), lambda i: (0, 0)),        # b1
                pl.BlockSpec((H, C), lambda i: (0, 0)),        # w2 (resident)
                pl.BlockSpec((1, C), lambda i: (0, 0)),        # b2
            ],
            out_specs=pl.BlockSpec((tm_eff, C), lambda i: (i, 0)),
        ),
        compiler_params=pltpu.CompilerParams(
            dimension_semantics=("parallel",)),
        cost_estimate=cost,
    )(x2d, w1, b1, w2, b2)
    return out


# ----------------------------------------------------------------------------
# Pure-JAX reference (f32) for correctness check
# ----------------------------------------------------------------------------
def scafnet_reference(params, x):
    x2d = x.reshape(-1, 784).astype(jnp.float32)
    h = x2d @ params['w1'] + params['b1']
    z = h @ params['w2'] + params['b2']
    return jax.nn.log_softmax(z, axis=1)


# ----------------------------------------------------------------------------
# Deterministic synthetic parameters (PyTorch nn.Linear default init ranges)
# ----------------------------------------------------------------------------
def init_params(key):
    k1, k2, k3, k4 = jax.random.split(key, 4)
    s1 = 1.0 / (784.0 ** 0.5)
    s2 = 1.0 / (256.0 ** 0.5)
    return {
        'w1': jax.random.uniform(k1, (784, 256), jnp.float32, -s1, s1),
        'b1': jax.random.uniform(k2, (256,), jnp.float32, -s1, s1),
        'w2': jax.random.uniform(k3, (256, 62), jnp.float32, -s2, s2),
        'b2': jax.random.uniform(k4, (62,), jnp.float32, -s2, s2),
    }


# ----------------------------------------------------------------------------
if __name__ == "__main__":
    key = jax.random.PRNGKey(0)
    pkey, xkey1, xkey2 = jax.random.split(key, 3)

    params = init_params(pkey)
    fwd = jax.jit(scafnet_forward)

    # Case 1: EMNIST-shaped input, single full-extent block.
    x1 = jax.random.normal(xkey1, (8, 1, 28, 28), jnp.float32)
    # Case 2: batch that exercises a multi-step grid with a partial last block.
    x2 = jax.random.normal(xkey2, (20, 1, 28, 28), jnp.float32)

    for x in (x1, x2):
        B = x.shape[0]
        logp = fwd(params, x)
        jax.block_until_ready(logp)

        assert logp.shape == (B, 62), logp.shape
        assert bool(jnp.all(jnp.isfinite(logp)))
        # log_softmax rows must exponentiate-sum to 1 (internal consistency).
        row_sums = jnp.sum(jnp.exp(logp), axis=1)
        assert bool(jnp.all(jnp.abs(row_sums - 1.0) < 1e-3)), row_sums
        # bf16-MXU result should track the f32 reference closely at these scales.
        ref = scafnet_reference(params, x)
        max_err = float(jnp.max(jnp.abs(logp - ref)))
        assert max_err < 5e-2, max_err

    print("KERNEL_OK")
</pallas_src>

<mosaic_0001>
module attributes {stable_mosaic.version = 11 : i64} {
  func.func @_scafnet_kernel(%arg0: i32, %arg1: memref<8x784xf32, #tpu.memory_space<vmem>>, %arg2: memref<784x256xbf16, #tpu.memory_space<vmem>>, %arg3: memref<1x256xf32, #tpu.memory_space<vmem>>, %arg4: memref<256x62xbf16, #tpu.memory_space<vmem>>, %arg5: memref<1x62xf32, #tpu.memory_space<vmem>>, %arg6: memref<8x62xf32, #tpu.memory_space<vmem>>) attributes {dimension_semantics = [#tpu.dimension_semantics<parallel>], iteration_bounds = array<i64: 1>, scalar_prefetch = 0 : i64, scratch_operands = 0 : i64, tpu.core_type = #tpu.core_type<tc>, window_params = [{transform_indices = @transform_0, window_bounds = array<i64: 8, 784>}, {pipeline_mode = #tpu.pipeline_mode<synchronous>, transform_indices = @transform_1, window_bounds = array<i64: 784, 256>}, {pipeline_mode = #tpu.pipeline_mode<synchronous>, transform_indices = @transform_2, window_bounds = array<i64: 1, 256>}, {pipeline_mode = #tpu.pipeline_mode<synchronous>, transform_indices = @transform_3, window_bounds = array<i64: 256, 62>}, {pipeline_mode = #tpu.pipeline_mode<synchronous>, transform_indices = @transform_4, window_bounds = array<i64: 1, 62>}, {transform_indices = @transform_5, window_bounds = array<i64: 8, 62>}]} {
    %c0 = arith.constant 0 : index
    %c0_0 = arith.constant 0 : index
    %0 = vector.load %arg1[%c0, %c0_0] : memref<8x784xf32, #tpu.memory_space<vmem>>, vector<8x784xf32>
    %1 = arith.truncf %0 : vector<8x784xf32> to vector<8x784xbf16>
    %c0_1 = arith.constant 0 : index
    %c0_2 = arith.constant 0 : index
    %2 = vector.load %arg2[%c0_1, %c0_2] : memref<784x256xbf16, #tpu.memory_space<vmem>>, vector<784x256xbf16>
    %cst = arith.constant dense<0.000000e+00> : vector<8x256xf32>
    %3 = tpu.matmul %1, %2, %cst {dimension_numbers = #tpu.dot_dimension_numbers<[1], [0], [0], [1], [0, 0, 1, 1], [], []>} : vector<8x784xbf16>, vector<784x256xbf16>, vector<8x256xf32> -> vector<8x256xf32>
    %c0_3 = arith.constant 0 : index
    %c0_4 = arith.constant 0 : index
    %4 = vector.load %arg3[%c0_3, %c0_4] : memref<1x256xf32, #tpu.memory_space<vmem>>, vector<1x256xf32>
    %5 = vector.broadcast %4 : vector<1x256xf32> to vector<8x256xf32>
    %6 = arith.addf %3, %5 : vector<8x256xf32>
    %7 = arith.truncf %6 : vector<8x256xf32> to vector<8x256xbf16>
    %c0_5 = arith.constant 0 : index
    %c0_6 = arith.constant 0 : index
    %8 = vector.load %arg4[%c0_5, %c0_6] : memref<256x62xbf16, #tpu.memory_space<vmem>>, vector<256x62xbf16>
    %cst_7 = arith.constant dense<0.000000e+00> : vector<8x62xf32>
    %9 = tpu.matmul %7, %8, %cst_7 {dimension_numbers = #tpu.dot_dimension_numbers<[1], [0], [0], [1], [0, 0, 1, 1], [], []>} : vector<8x256xbf16>, vector<256x62xbf16>, vector<8x62xf32> -> vector<8x62xf32>
    %c0_8 = arith.constant 0 : index
    %c0_9 = arith.constant 0 : index
    %10 = vector.load %arg5[%c0_8, %c0_9] : memref<1x62xf32, #tpu.memory_space<vmem>>, vector<1x62xf32>
    %11 = vector.broadcast %10 : vector<1x62xf32> to vector<8x62xf32>
    %12 = arith.addf %9, %11 : vector<8x62xf32>
    %cst_10 = arith.constant dense<0xFF800000> : vector<8xf32>
    %13 = vector.multi_reduction <maximumf>, %12, %cst_10 [1] : vector<8x62xf32> to vector<8xf32>
    %14 = vector.shape_cast %13 : vector<8xf32> to vector<8x1xf32>
    %15 = vector.broadcast %14 : vector<8x1xf32> to vector<8x62xf32>
    %16 = arith.subf %12, %15 : vector<8x62xf32>
    %17 = math.exp %16 : vector<8x62xf32>
    %cst_11 = arith.constant dense<0.000000e+00> : vector<8xf32>
    %18 = vector.multi_reduction <add>, %17, %cst_11 [1] : vector<8x62xf32> to vector<8xf32>
    %19 = vector.shape_cast %18 : vector<8xf32> to vector<8x1xf32>
    %20 = math.log %19 : vector<8x1xf32>
    %21 = arith.addf %20, %14 : vector<8x1xf32>
    %22 = vector.broadcast %21 : vector<8x1xf32> to vector<8x62xf32>
    %23 = arith.subf %12, %22 : vector<8x62xf32>
    %c0_12 = arith.constant 0 : index
    %c0_13 = arith.constant 0 : index
    %24 = vector.load %arg6[%c0_12, %c0_13] : memref<8x62xf32, #tpu.memory_space<vmem>>, vector<8x62xf32>
    tpu.vector_store %arg6[%c0_12, %c0_13], %23 {strides = array<i32>} : memref<8x62xf32, #tpu.memory_space<vmem>>, vector<8x62xf32>,
    return
  }
  func.func @transform_0(%arg0: i32) -> (i32, i32) {
    %c0_i32 = arith.constant 0 : i32
    %c0_i32_0 = arith.constant 0 : i32
    return %arg0, %c0_i32 : i32, i32
  }
  func.func @transform_1(%arg0: i32) -> (i32, i32) {
    %c0_i32 = arith.constant 0 : i32
    %c0_i32_0 = arith.constant 0 : i32
    %c0_i32_1 = arith.constant 0 : i32
    return %c0_i32, %c0_i32_0 : i32, i32
  }
  func.func @transform_2(%arg0: i32) -> (i32, i32) {
    %c0_i32 = arith.constant 0 : i32
    %c0_i32_0 = arith.constant 0 : i32
    %c0_i32_1 = arith.constant 0 : i32
    return %c0_i32, %c0_i32_0 : i32, i32
  }
  func.func @transform_3(%arg0: i32) -> (i32, i32) {
    %c0_i32 = arith.constant 0 : i32
    %c0_i32_0 = arith.constant 0 : i32
    %c0_i32_1 = arith.constant 0 : i32
    return %c0_i32, %c0_i32_0 : i32, i32
  }
  func.func @transform_4(%arg0: i32) -> (i32, i32) {
    %c0_i32 = arith.constant 0 : i32
    %c0_i32_0 = arith.constant 0 : i32
    %c0_i32_1 = arith.constant 0 : i32
    return %c0_i32, %c0_i32_0 : i32, i32
  }
  func.func @transform_5(%arg0: i32) -> (i32, i32) {
    %c0_i32 = arith.constant 0 : i32
    %c0_i32_0 = arith.constant 0 : i32
    return %arg0, %c0_i32 : i32, i32
  }
}

</mosaic_0001>

<llo_original>
// kernel: scafnet_forward.1
$region0: #{scafnet_forward.1}
  #allocation0 [shape = 'u32[]', space=smem, size = 0x4, offset = 0x4, fixed_abs, tag = 'smem constant byte address 0x4 - core index']
  #allocation1 [shape = 'u32[144,128]{1,0:T(1,128)}', space=vmem, size = 0x12000, scoped, tag = 'internal scratch']
  %s0 = inlined_call_operand.vmem [shape: f32[8,784], index: 0, kind: input, shape index: {}]
  %s1 = inlined_call_operand.vmem [shape: bf16[784,256], index: 1, kind: input, shape index: {}]
  %s2 = inlined_call_operand.vmem [shape: f32[1,256], index: 2, kind: input, shape index: {}]
  %s3 = inlined_call_operand.vmem [shape: bf16[256,62], index: 3, kind: input, shape index: {}]
  %s4 = inlined_call_operand.vmem [shape: f32[1,62], index: 4, kind: input, shape index: {}]
  %s5 = inlined_call_operand.hbm [shape: f32[8,62], index: 5, kind: output, shape index: {}]
  %s6 = sld [smem:[#allocation0]]
  $region30: #{scafnet_forward.1} parent=0
    _
  %s8 = ssub.s32 1, %s6
  %s9 = scalar_select 0, %s8, %s6
  $region1: #{scafnet_forward.1} parent=0
    #allocation2 [shape = 'u8[4096]{0}', space=vmem, size = 0x1000, scoped, tag = 'output window, operand 0, single buffered']
    #allocation3 [shape = 's32[1]{0}', space=sflag, size = 0x4, scoped, tag = 'scoped memory for scafnet_forward.1']
    %10 = vsyncpa [#allocation3], 0
    // Predicated region
    $region2: #{scafnet_forward.1} parent=1 // pred_check
      _
    $region3: #{scafnet_forward.1} parent=1 // pred_check_branch
      %12 = sbr.rel (0) target = $region5
    $region4: #{scafnet_forward.1} parent=1 // pred_region
      _
    $region5: #{scafnet_forward.1} parent=1 // pred_fallthru
      _
    // Predicated region
    $region6: #{scafnet_forward.1} parent=1 // pred_check
      _
    $region7: #{scafnet_forward.1} parent=1 // pred_check_branch
      %14 = sbr.rel (0) target = $region9
    $region8: #{scafnet_forward.1} parent=1 // pred_region
      _
    $region9: #{scafnet_forward.1} parent=1 // pred_fallthru
      _
    // Predicated region
    $region10: #{scafnet_forward.1} parent=1 // pred_check
      _
    $region11: #{scafnet_forward.1} parent=1 // pred_check_branch
      %16 = sbr.rel (0) target = $region13
    $region12: #{scafnet_forward.1} parent=1 // pred_region
      _
    $region13: #{scafnet_forward.1} parent=1 // pred_fallthru
      _
    // Predicated region
    $region14: #{scafnet_forward.1} parent=1 // pred_check
      _
    $region15: #{scafnet_forward.1} parent=1 // pred_check_branch
      %18 = sbr.rel (0) target = $region17
    $region16: #{scafnet_forward.1} parent=1 // pred_region
      _
    $region17: #{scafnet_forward.1} parent=1 // pred_fallthru
      _
    // Predicated region
    $region18: #{scafnet_forward.1} parent=1 // pred_check
      _
    $region19: #{scafnet_forward.1} parent=1 // pred_check_branch
      %20 = sbr.rel (0) target = $region21
    $region20: #{scafnet_forward.1} parent=1 // pred_region
      _
    $region21: #{scafnet_forward.1} parent=1 // pred_fallthru
      _
    %v22 = vld [vmem:[%s0] sm:$0xff]
    %v23 = vld [vmem:[%s0 + $0x8] sm:$0xff]
    %v24 = vld [vmem:[%s0 + $0x10] sm:$0xff]
    %v25 = vld [vmem:[%s0 + $0x18] sm:$0xff]
    %v26 = vld [vmem:[%s0 + $0x20] sm:$0xff]
    %v27 = vld [vmem:[%s0 + $0x28] sm:$0xff]
    %v28 = vld [vmem:[%s0 + $0x30] sm:$0xff]
    %v29 = vpack.c.bf16 %v22, %v22
    %v30 = vpack.c.bf16 %v23, %v23
    %v31 = vpack.c.bf16 %v24, %v24
    %v32 = vpack.c.bf16 %v25, %v25
    %v33 = vpack.c.bf16 %v26, %v26
    %v34 = vpack.c.bf16 %v27, %v27
    %v35 = vpack.c.bf16 %v28, %v28
    %v36 = vld [vmem:[%s1] sm:$0xff]
    %v37 = vld [vmem:[%s1 + $0x8] sm:$0xff]
    %v38 = vld [vmem:[%s1 + $0x10] sm:$0xff]
    %v39 = vld [vmem:[%s1 + $0x18] sm:$0xff]
    %v40 = vld [vmem:[%s1 + $0x20] sm:$0xff]
    %v41 = vld [vmem:[%s1 + $0x28] sm:$0xff]
    %v42 = vld [vmem:[%s1 + $0x30] sm:$0xff]
    %v43 = vld [vmem:[%s1 + $0x38] sm:$0xff]
    %v44 = vld [vmem:[%s1 + $0x40] sm:$0xff]
    %v45 = vld [vmem:[%s1 + $0x48] sm:$0xff]
    %v46 = vld [vmem:[%s1 + $0x50] sm:$0xff]
    %v47 = vld [vmem:[%s1 + $0x58] sm:$0xff]
    %v48 = vld [vmem:[%s1 + $0x60] sm:$0xff]
    %v49 = vld [vmem:[%s1 + $0x68] sm:$0xff]
    %v50 = vld [vmem:[%s1 + $0x70] sm:$0xff]
    %v51 = vld [vmem:[%s1 + $0x78] sm:$0xff]
    %v52 = vld [vmem:[%s1 + $0x80] sm:$0xff]
    %v53 = vld [vmem:[%s1 + $0x88] sm:$0xff]
    %v54 = vld [vmem:[%s1 + $0x90] sm:$0xff]
    %v55 = vld [vmem:[%s1 + $0x98] sm:$0xff]
    %v56 = vld [vmem:[%s1 + $0xa0] sm:$0xff]
    %v57 = vld [vmem:[%s1 + $0xa8] sm:$0xff]
    %v58 = vld [vmem:[%s1 + $0xb0] sm:$0xff]
    %v59 = vld [vmem:[%s1 + $0xb8] sm:$0xff]
    %v60 = vld [vmem:[%s1 + $0xc0] sm:$0xff]
    %v61 = vld [vmem:[%s1 + $0xc8] sm:$0xff]
    %v62 = vld [vmem:[%s1 + $0xd0] sm:$0xff]
    %v63 = vld [vmem:[%s1 + $0xd8] sm:$0xff]
    %v64 = vld [vmem:[%s1 + $0xe0] sm:$0xff]
    %v65 = vld [vmem:[%s1 + $0xe8] sm:$0xff]
    %v66 = vld [vmem:[%s1 + $0xf0] sm:$0xff]
    %v67 = vld [vmem:[%s1 + $0xf8] sm:$0xff]
    %v68 = vld [vmem:[%s1 + $0x100] sm:$0xff]
    %v69 = vld [vmem:[%s1 + $0x108] sm:$0xff]
    %v70 = vld [vmem:[%s1 + $0x110] sm:$0xff]
    %v71 = vld [vmem:[%s1 + $0x118] sm:$0xff]
    %v72 = vld [vmem:[%s1 + $0x120] sm:$0xff]
    %v73 = vld [vmem:[%s1 + $0x128] sm:$0xff]
    %v74 = vld [vmem:[%s1 + $0x130] sm:$0xff]
    %v75 = vld [vmem:[%s1 + $0x138] sm:$0xff]
    %v76 = vld [vmem:[%s1 + $0x140] sm:$0xff]
    %v77 = vld [vmem:[%s1 + $0x148] sm:$0xff]
    %v78 = vld [vmem:[%s1 + $0x150] sm:$0xff]
    %v79 = vld [vmem:[%s1 + $0x158] sm:$0xff]
    %v80 = vld [vmem:[%s1 + $0x160] sm:$0xff]
    %v81 = vld [vmem:[%s1 + $0x168] sm:$0xff]
    %v82 = vld [vmem:[%s1 + $0x170] sm:$0xff]
    %v83 = vld [vmem:[%s1 + $0x178] sm:$0xff]
    %v84 = vld [vmem:[%s1 + $0x180] sm:$0xff]
    %v85 = vld [vmem:[%s1 + $0x188] sm:$0xff]
    %v86 = vld [vmem:[%s1 + $0x190] sm:$0xff]
    %v87 = vld [vmem:[%s1 + $0x198] sm:$0xff]
    %v88 = vld [vmem:[%s1 + $0x1a0] sm:$0xff]
    %v89 = vld [vmem:[%s1 + $0x1a8] sm:$0xff]
    %v90 = vld [vmem:[%s1 + $0x1b0] sm:$0xff]
    %v91 = vld [vmem:[%s1 + $0x1b8] sm:$0xff]
    %v92 = vld [vmem:[%s1 + $0x1c0] sm:$0xff]
    %v93 = vld [vmem:[%s1 + $0x1c8] sm:$0xff]
    %v94 = vld [vmem:[%s1 + $0x1d0] sm:$0xff]
    %v95 = vld [vmem:[%s1 + $0x1d8] sm:$0xff]
    %v96 = vld [vmem:[%s1 + $0x1e0] sm:$0xff]
    %v97 = vld [vmem:[%s1 + $0x1e8] sm:$0xff]
    %v98 = vld [vmem:[%s1 + $0x1f0] sm:$0xff]
    %v99 = vld [vmem:[%s1 + $0x1f8] sm:$0xff]
    %v100 = vld [vmem:[%s1 + $0x200] sm:$0xff]
    %v101 = vld [vmem:[%s1 + $0x208] sm:$0xff]
    %v102 = vld [vmem:[%s1 + $0x210] sm:$0xff]
    %v103 = vld [vmem:[%s1 + $0x218] sm:$0xff]
    %v104 = vld [vmem:[%s1 + $0x220] sm:$0xff]
    %v105 = vld [vmem:[%s1 + $0x228] sm:$0xff]
    %v106 = vld [vmem:[%s1 + $0x230] sm:$0xff]
    %v107 = vld [vmem:[%s1 + $0x238] sm:$0xff]
    %v108 = vld [vmem:[%s1 + $0x240] sm:$0xff]
    %v109 = vld [vmem:[%s1 + $0x248] sm:$0xff]
    %v110 = vld [vmem:[%s1 + $0x250] sm:$0xff]
    %v111 = vld [vmem:[%s1 + $0x258] sm:$0xff]
    %v112 = vld [vmem:[%s1 + $0x260] sm:$0xff]
    %v113 = vld [vmem:[%s1 + $0x268] sm:$0xff]
    %v114 = vld [vmem:[%s1 + $0x270] sm:$0xff]
    %v115 = vld [vmem:[%s1 + $0x278] sm:$0xff]
    %v116 = vld [vmem:[%s1 + $0x280] sm:$0xff]
    %v117 = vld [vmem:[%s1 + $0x288] sm:$0xff]
    %v118 = vld [vmem:[%s1 + $0x290] sm:$0xff]
    %v119 = vld [vmem:[%s1 + $0x298] sm:$0xff]
    %v120 = vld [vmem:[%s1 + $0x2a0] sm:$0xff]
    %v121 = vld [vmem:[%s1 + $0x2a8] sm:$0xff]
    %v122 = vld [vmem:[%s1 + $0x2b0] sm:$0xff]
    %v123 = vld [vmem:[%s1 + $0x2b8] sm:$0xff]
    %v124 = vld [vmem:[%s1 + $0x2c0] sm:$0xff]
    %v125 = vld [vmem:[%s1 + $0x2c8] sm:$0xff]
    %v126 = vld [vmem:[%s1 + $0x2d0] sm:$0xff]
    %v127 = vld [vmem:[%s1 + $0x2d8] sm:$0xff]
    %v128 = vld [vmem:[%s1 + $0x2e0] sm:$0xff]
    %v129 = vld [vmem:[%s1 + $0x2e8] sm:$0xff]
    %v130 = vld [vmem:[%s1 + $0x2f0] sm:$0xff]
    %v131 = vld [vmem:[%s1 + $0x2f8] sm:$0xff]
    %v132 = vld [vmem:[%s1 + $0x300] sm:$0xff]
    %v133 = vld [vmem:[%s1 + $0x308] sm:$0xff]
    %v134 = vld [vmem:[%s2] sm:$0x3]
    %v136 = vlaneseq
    %v137 = vshrl.u32 %v136, 7
    %v138 = vsub.s32 0, %v137
    %v139 = vrot.slane %v134, %v138
    %v140 = vlaneseq
    %v141 = vshrl.u32 %v140, 7
    %v142 = vsub.s32 1, %v141
    %v143 = vrot.slane %v134, %v142
    %v244 = vunpack.c.l.b16 %v36
    %v245 = vunpack.c.h.b16 %v36
    %v246 = vunpack.c.l.b16 %v37
    %v247 = vunpack.c.h.b16 %v37
    %v248 = vunpack.c.l.b16 %v38
    %v249 = vunpack.c.h.b16 %v38
    %v250 = vunpack.c.l.b16 %v39
    %v251 = vunpack.c.h.b16 %v39
    %v252 = vunpack.c.l.b16 %v40
    %v253 = vunpack.c.h.b16 %v40
    %v254 = vunpack.c.l.b16 %v41
    %v255 = vunpack.c.h.b16 %v41
    %v256 = vunpack.c.l.b16 %v42
    %v257 = vunpack.c.h.b16 %v42
    %v258 = vunpack.c.l.b16 %v43
    %v259 = vunpack.c.h.b16 %v43
    %v260 = vunpack.c.l.b16 %v44
    %v261 = vunpack.c.h.b16 %v44
    %v262 = vunpack.c.l.b16 %v45
    %v263 = vunpack.c.h.b16 %v45
    %v264 = vunpack.c.l.b16 %v46
    %v265 = vunpack.c.h.b16 %v46
    %v266 = vunpack.c.l.b16 %v47
    %v267 = vunpack.c.h.b16 %v47
    %v268 = vunpack.c.l.b16 %v48
    %v269 = vunpack.c.h.b16 %v48
    %v270 = vunpack.c.l.b16 %v49
    %v271 = vunpack.c.h.b16 %v49
    %v272 = vunpack.c.l.b16 %v50
    %v273 = vunpack.c.h.b16 %v50
    %v274 = vunpack.c.l.b16 %v51
    %v275 = vunpack.c.h.b16 %v51
    %v276 = vunpack.c.l.b16 %v52
    %v277 = vunpack.c.h.b16 %v52
    %v278 = vunpack.c.l.b16 %v53
    %v279 = vunpack.c.h.b16 %v53
    %v280 = vunpack.c.l.b16 %v54
    %v281 = vunpack.c.h.b16 %v54
    %v282 = vunpack.c.l.b16 %v55
    %v283 = vunpack.c.h.b16 %v55
    %v284 = vunpack.c.l.b16 %v56
    %v285 = vunpack.c.h.b16 %v56
    %v286 = vunpack.c.l.b16 %v57
    %v287 = vunpack.c.h.b16 %v57
    %v288 = vunpack.c.l.b16 %v58
    %v289 = vunpack.c.h.b16 %v58
    %v290 = vunpack.c.l.b16 %v59
    %v291 = vunpack.c.h.b16 %v59
    %v292 = vunpack.c.l.b16 %v60
    %v293 = vunpack.c.h.b16 %v60
    %v294 = vunpack.c.l.b16 %v61
    %v295 = vunpack.c.h.b16 %v61
    %v296 = vunpack.c.l.b16 %v62
    %v297 = vunpack.c.h.b16 %v62
    %v298 = vunpack.c.l.b16 %v63
    %v299 = vunpack.c.h.b16 %v63
    %v300 = vunpack.c.l.b16 %v64
    %v301 = vunpack.c.h.b16 %v64
    %v302 = vunpack.c.l.b16 %v65
    %v303 = vunpack.c.h.b16 %v65
    %v304 = vunpack.c.l.b16 %v66
    %v305 = vunpack.c.h.b16 %v66
    %v306 = vunpack.c.l.b16 %v67
    %v307 = vunpack.c.h.b16 %v67
    %v308 = vunpack.c.l.b16 %v68
    %v309 = vunpack.c.h.b16 %v68
    %v310 = vunpack.c.l.b16 %v69
    %v311 = vunpack.c.h.b16 %v69
    %v312 = vunpack.c.l.b16 %v70
    %v313 = vunpack.c.h.b16 %v70
    %v314 = vunpack.c.l.b16 %v71
    %v315 = vunpack.c.h.b16 %v71
    %v316 = vunpack.c.l.b16 %v72
    %v317 = vunpack.c.h.b16 %v72
    %v318 = vunpack.c.l.b16 %v73
    %v319 = vunpack.c.h.b16 %v73
    %v320 = vunpack.c.l.b16 %v74
    %v321 = vunpack.c.h.b16 %v74
    %v322 = vunpack.c.l.b16 %v75
    %v323 = vunpack.c.h.b16 %v75
    %v324 = vunpack.c.l.b16 %v76
    %v325 = vunpack.c.h.b16 %v76
    %v326 = vunpack.c.l.b16 %v77
    %v327 = vunpack.c.h.b16 %v77
    %v328 = vunpack.c.l.b16 %v78
    %v329 = vunpack.c.h.b16 %v78
    %v330 = vunpack.c.l.b16 %v79
    %v331 = vunpack.c.h.b16 %v79
    %v332 = vunpack.c.l.b16 %v80
    %v333 = vunpack.c.h.b16 %v80
    %v334 = vunpack.c.l.b16 %v81
    %v335 = vunpack.c.h.b16 %v81
    %v336 = vunpack.c.l.b16 %v82
    %v337 = vunpack.c.h.b16 %v82
    %v338 = vunpack.c.l.b16 %v83
    %v339 = vunpack.c.h.b16 %v83
    %v340 = vunpack.c.l.b16 %v84
    %v341 = vunpack.c.h.b16 %v84
    %v342 = vunpack.c.l.b16 %v85
    %v343 = vunpack.c.h.b16 %v85
    %v344 = vunpack.c.l.b16 %v86
    %v345 = vunpack.c.h.b16 %v86
    %v346 = vunpack.c.l.b16 %v87
    %v347 = vunpack.c.h.b16 %v87
    %v348 = vunpack.c.l.b16 %v88
    %v349 = vunpack.c.h.b16 %v88
    %v350 = vunpack.c.l.b16 %v89
    %v351 = vunpack.c.h.b16 %v89
    %v352 = vunpack.c.l.b16 %v90
    %v353 = vunpack.c.h.b16 %v90
    %v354 = vunpack.c.l.b16 %v91
    %v355 = vunpack.c.h.b16 %v91
    %v356 = vunpack.c.l.b16 %v92
    %v357 = vunpack.c.h.b16 %v92
    %v358 = vunpack.c.l.b16 %v93
    %v359 = vunpack.c.h.b16 %v93
    %v360 = vunpack.c.l.b16 %v94
    %v361 = vunpack.c.h.b16 %v94
    %v362 = vunpack.c.l.b16 %v95
    %v363 = vunpack.c.h.b16 %v95
    %v364 = vunpack.c.l.b16 %v96
    %v365 = vunpack.c.h.b16 %v96
    %v366 = vunpack.c.l.b16 %v97
    %v367 = vunpack.c.h.b16 %v97
    %v368 = vunpack.c.l.b16 %v98
    %v369 = vunpack.c.h.b16 %v98
    %v370 = vunpack.c.l.b16 %v99
    %v371 = vunpack.c.h.b16 %v99
    %v372 = vunpack.c.l.b16 %v100
    %v373 = vunpack.c.h.b16 %v100
    %v374 = vunpack.c.l.b16 %v101
    %v375 = vunpack.c.h.b16 %v101
    %v376 = vunpack.c.l.b16 %v102
    %v377 = vunpack.c.h.b16 %v102
    %v378 = vunpack.c.l.b16 %v103
    %v379 = vunpack.c.h.b16 %v103
    %v380 = vunpack.c.l.b16 %v104
    %v381 = vunpack.c.h.b16 %v104
    %v382 = vunpack.c.l.b16 %v105
    %v383 = vunpack.c.h.b16 %v105
    %v384 = vunpack.c.l.b16 %v106
    %v385 = vunpack.c.h.b16 %v106
    %v386 = vunpack.c.l.b16 %v107
    %v387 = vunpack.c.h.b16 %v107
    %v388 = vunpack.c.l.b16 %v108
    %v389 = vunpack.c.h.b16 %v108
    %v390 = vunpack.c.l.b16 %v109
    %v391 = vunpack.c.h.b16 %v109
    %v392 = vunpack.c.l.b16 %v110
    %v393 = vunpack.c.h.b16 %v110
    %v394 = vunpack.c.l.b16 %v111
    %v395 = vunpack.c.h.b16 %v111
    %v396 = vunpack.c.l.b16 %v112
    %v397 = vunpack.c.h.b16 %v112
    %v398 = vunpack.c.l.b16 %v113
    %v399 = vunpack.c.h.b16 %v113
    %v400 = vunpack.c.l.b16 %v114
    %v401 = vunpack.c.h.b16 %v114
    %v402 = vunpack.c.l.b16 %v115
    %v403 = vunpack.c.h.b16 %v115
    %v404 = vunpack.c.l.b16 %v116
    %v405 = vunpack.c.h.b16 %v116
    %v406 = vunpack.c.l.b16 %v117
    %v407 = vunpack.c.h.b16 %v117
    %v408 = vunpack.c.l.b16 %v118
    %v409 = vunpack.c.h.b16 %v118
    %v410 = vunpack.c.l.b16 %v119
    %v411 = vunpack.c.h.b16 %v119
    %v412 = vunpack.c.l.b16 %v120
    %v413 = vunpack.c.h.b16 %v120
    %v414 = vunpack.c.l.b16 %v121
    %v415 = vunpack.c.h.b16 %v121
    %v416 = vunpack.c.l.b16 %v122
    %v417 = vunpack.c.h.b16 %v122
    %v418 = vunpack.c.l.b16 %v123
    %v419 = vunpack.c.h.b16 %v123
    %v420 = vunpack.c.l.b16 %v124
    %v421 = vunpack.c.h.b16 %v124
    %v422 = vunpack.c.l.b16 %v125
    %v423 = vunpack.c.h.b16 %v125
    %v424 = vunpack.c.l.b16 %v126
    %v425 = vunpack.c.h.b16 %v126
    %v426 = vunpack.c.l.b16 %v127
    %v427 = vunpack.c.h.b16 %v127
    %v428 = vunpack.c.l.b16 %v128
    %v429 = vunpack.c.h.b16 %v128
    %v430 = vunpack.c.l.b16 %v129
    %v431 = vunpack.c.h.b16 %v129
    %v432 = vunpack.c.l.b16 %v130
    %v433 = vunpack.c.h.b16 %v130
    %v434 = vunpack.c.l.b16 %v131
    %v435 = vunpack.c.h.b16 %v131
    %v436 = vunpack.c.l.b16 %v132
    %v437 = vunpack.c.h.b16 %v132
    %v438 = vunpack.c.l.b16 %v133
    %v439 = vunpack.c.h.b16 %v133
    %v440 = vpack.c.b16 %v246, %v244
    %v441 = vpack.c.b16 %v247, %v245
    %v442 = vpack.c.b16 %v250, %v248
    %v443 = vpack.c.b16 %v251, %v249
    %v444 = vpack.c.b16 %v254, %v252
    %v445 = vpack.c.b16 %v255, %v253
    %v446 = vpack.c.b16 %v258, %v256
    %v447 = vpack.c.b16 %v259, %v257
    %v448 = vpack.c.b16 %v262, %v260
    %v449 = vpack.c.b16 %v263, %v261
    %v450 = vpack.c.b16 %v266, %v264
    %v451 = vpack.c.b16 %v267, %v265
    %v452 = vpack.c.b16 %v270, %v268
    %v453 = vpack.c.b16 %v271, %v269
    %v454 = vpack.c.b16 %v274, %v272
    %v455 = vpack.c.b16 %v275, %v273
    %v456 = vpack.c.b16 %v278, %v276
    %v457 = vpack.c.b16 %v279, %v277
    %v458 = vpack.c.b16 %v282, %v280
    %v459 = vpack.c.b16 %v283, %v281
    %v460 = vpack.c.b16 %v286, %v284
    %v461 = vpack.c.b16 %v287, %v285
    %v462 = vpack.c.b16 %v290, %v288
    %v463 = vpack.c.b16 %v291, %v289
    %v464 = vpack.c.b16 %v294, %v292
    %v465 = vpack.c.b16 %v295, %v293
    %v466 = vpack.c.b16 %v298, %v296
    %v467 = vpack.c.b16 %v299, %v297
    %v468 = vpack.c.b16 %v302, %v300
    %v469 = vpack.c.b16 %v303, %v301
    %v470 = vpack.c.b16 %v306, %v304
    %v471 = vpack.c.b16 %v307, %v305
    %v472 = vpack.c.b16 %v310, %v308
    %v473 = vpack.c.b16 %v311, %v309
    %v474 = vpack.c.b16 %v314, %v312
    %v475 = vpack.c.b16 %v315, %v313
    %v476 = vpack.c.b16 %v318, %v316
    %v477 = vpack.c.b16 %v319, %v317
    %v478 = vpack.c.b16 %v322, %v320
    %v479 = vpack.c.b16 %v323, %v321
    %v480 = vpack.c.b16 %v326, %v324
    %v481 = vpack.c.b16 %v327, %v325
    %v482 = vpack.c.b16 %v330, %v328
    %v483 = vpack.c.b16 %v331, %v329
    %v484 = vpack.c.b16 %v334, %v332
    %v485 = vpack.c.b16 %v335, %v333
    %v486 = vpack.c.b16 %v338, %v336
    %v487 = vpack.c.b16 %v339, %v337
    %v488 = vpack.c.b16 %v342, %v340
    %v489 = vpack.c.b16 %v343, %v341
    %v490 = vpack.c.b16 %v346, %v344
    %v491 = vpack.c.b16 %v347, %v345
    %v492 = vpack.c.b16 %v350, %v348
    %v493 = vpack.c.b16 %v351, %v349
    %v494 = vpack.c.b16 %v354, %v352
    %v495 = vpack.c.b16 %v355, %v353
    %v496 = vpack.c.b16 %v358, %v356
    %v497 = vpack.c.b16 %v359, %v357
    %v498 = vpack.c.b16 %v362, %v360
    %v499 = vpack.c.b16 %v363, %v361
    %v500 = vpack.c.b16 %v366, %v364
    %v501 = vpack.c.b16 %v367, %v365
    %v502 = vpack.c.b16 %v370, %v368
    %v503 = vpack.c.b16 %v371, %v369
    %v504 = vpack.c.b16 %v374, %v372
    %v505 = vpack.c.b16 %v375, %v373
    %v506 = vpack.c.b16 %v378, %v376
    %v507 = vpack.c.b16 %v379, %v377
    %v508 = vpack.c.b16 %v382, %v380
    %v509 = vpack.c.b16 %v383, %v381
    %v510 = vpack.c.b16 %v386, %v384
    %v511 = vpack.c.b16 %v387, %v385
    %v512 = vpack.c.b16 %v390, %v388
    %v513 = vpack.c.b16 %v391, %v389
    %v514 = vpack.c.b16 %v394, %v392
    %v515 = vpack.c.b16 %v395, %v393
    %v516 = vpack.c.b16 %v398, %v396
    %v517 = vpack.c.b16 %v399, %v397
    %v518 = vpack.c.b16 %v402, %v400
    %v519 = vpack.c.b16 %v403, %v401
    %v520 = vpack.c.b16 %v406, %v404
    %v521 = vpack.c.b16 %v407, %v405
    %v522 = vpack.c.b16 %v410, %v408
    %v523 = vpack.c.b16 %v411, %v409
    %v524 = vpack.c.b16 %v414, %v412
    %v525 = vpack.c.b16 %v415, %v413
    %v526 = vpack.c.b16 %v418, %v416
    %v527 = vpack.c.b16 %v419, %v417
    %v528 = vpack.c.b16 %v422, %v420
    %v529 = vpack.c.b16 %v423, %v421
    %v530 = vpack.c.b16 %v426, %v424
    %v531 = vpack.c.b16 %v427, %v425
    %v532 = vpack.c.b16 %v430, %v428
    %v533 = vpack.c.b16 %v431, %v429
    %v534 = vpack.c.b16 %v434, %v432
    %v535 = vpack.c.b16 %v435, %v433
    %v536 = vpack.c.b16 %v438, %v436
    %v537 = vpack.c.b16 %v439, %v437
    %vm636 = vcmask 130048
    %v638 = vsel %vm636, %v35, 0
    %640 = vmatprep.subr.bf16.mxu0 %v455
    %641 = vmatpush1.bf16.msra.mxu0 %v454
    %642 = vmatprep.subr.bf16.mxu0 %v453
    %643 = vmatpush1.bf16.msra.mxu0 %v452
    %644 = vmatprep.subr.bf16.mxu0 %v451
    %645 = vmatpush1.bf16.msra.mxu0 %v450
    %646 = vmatprep.subr.bf16.mxu0 %v449
    %647 = vmatpush1.bf16.msra.mxu0 %v448
    %648 = vmatprep.subr.bf16.mxu0 %v447
    %649 = vmatpush1.bf16.msra.mxu0 %v446
    %650 = vmatprep.subr.bf16.mxu0 %v445
    %651 = vmatpush1.bf16.msra.mxu0 %v444
    %652 = vmatprep.subr.bf16.mxu0 %v443
    %653 = vmatpush1.bf16.msra.mxu0 %v442
    %654 = vmatprep.subr.bf16.mxu0 %v441
    %655 = vmatpush1.bf16.msra.mxu0 %v440
    %656 = vmatprep.subr.bf16.mxu0 %v471
    %657 = vmatpush2.bf16.msra.mxu0 %v470
    %658 = vmatprep.subr.bf16.mxu0 %v469
    %659 = vmatpush2.bf16.msra.mxu0 %v468
    %660 = vmatprep.subr.bf16.mxu0 %v467
    %661 = vmatpush2.bf16.msra.mxu0 %v466
    %662 = vmatprep.subr.bf16.mxu0 %v465
    %663 = vmatpush2.bf16.msra.mxu0 %v464
    %664 = vmatprep.subr.bf16.mxu0 %v463
    %665 = vmatpush2.bf16.msra.mxu0 %v462
    %666 = vmatprep.subr.bf16.mxu0 %v461
    %667 = vmatpush2.bf16.msra.mxu0 %v460
    %668 = vmatprep.subr.bf16.mxu0 %v459
    %669 = vmatpush2.bf16.msra.mxu0 %v458
    %670 = vmatprep.subr.bf16.mxu0 %v457
    %671 = vmatpush2.bf16.msra.mxu0 %v456
    %672 = vmatprep.mubr.bf16.mxu0 %v30
    %673 = vmatmul.mubr.bf16.gmra.mxu0 %v29
    %v674 = vpop.f32.mrf.mxu0
    %v675 = vadd.f32 %v139, %v674
    %v676 = vpop.f32.mrf.mxu0
    %v677 = vadd.f32 %v143, %v676
    %v678 = vpop.f32.mrf.mxu0
    %v679 = vpop.f32.mrf.mxu0
    %680 = vdwg.mxu0
    %681 = vmatprep.subr.bf16.mxu0 %v487
    %682 = vmatpush1.bf16.msra.mxu0 %v486
    %683 = vmatprep.subr.bf16.mxu0 %v485
    %684 = vmatpush1.bf16.msra.mxu0 %v484
    %685 = vmatprep.subr.bf16.mxu0 %v483
    %686 = vmatpush1.bf16.msra.mxu0 %v482
    %687 = vmatprep.subr.bf16.mxu0 %v481
    %688 = vmatpush1.bf16.msra.mxu0 %v480
    %689 = vmatprep.subr.bf16.mxu0 %v479
    %690 = vmatpush1.bf16.msra.mxu0 %v478
    %691 = vmatprep.subr.bf16.mxu0 %v477
    %692 = vmatpush1.bf16.msra.mxu0 %v476
    %693 = vmatprep.subr.bf16.mxu0 %v475
    %694 = vmatpush1.bf16.msra.mxu0 %v474
    %695 = vmatprep.subr.bf16.mxu0 %v473
    %696 = vmatpush1.bf16.msra.mxu0 %v472
    %697 = vmatprep.subr.bf16.mxu0 %v503
    %698 = vmatpush2.bf16.msra.mxu0 %v502
    %699 = vmatprep.subr.bf16.mxu0 %v501
    %700 = vmatpush2.bf16.msra.mxu0 %v500
    %701 = vmatprep.subr.bf16.mxu0 %v499
    %702 = vmatpush2.bf16.msra.mxu0 %v498
    %703 = vmatprep.subr.bf16.mxu0 %v497
    %704 = vmatpush2.bf16.msra.mxu0 %v496
    %705 = vmatprep.subr.bf16.mxu0 %v495
    %706 = vmatpush2.bf16.msra.mxu0 %v494
    %707 = vmatprep.subr.bf16.mxu0 %v493
    %708 = vmatpush2.bf16.msra.mxu0 %v492
    %709 = vmatprep.subr.bf16.mxu0 %v491
    %710 = vmatpush2.bf16.msra.mxu0 %v490
    %711 = vmatprep.subr.bf16.mxu0 %v489
    %712 = vmatpush2.bf16.msra.mxu0 %v488
    %713 = vmatprep.mubr.bf16.mxu0 %v32
    %714 = vmatmul.mubr.bf16.gmra.mxu0 %v31
    %v715 = vpop.f32.mrf.mxu0
    %v716 = vadd.f32 %v675, %v715
    %v717 = vpop.f32.mrf.mxu0
    %v718 = vadd.f32 %v677, %v717
    %v719 = vpop.f32.mrf.mxu0
    %v720 = vpop.f32.mrf.mxu0
    %721 = vdwg.mxu0
    %722 = vmatprep.subr.bf16.mxu0 %v519
    %723 = vmatpush1.bf16.msra.mxu0 %v518
    %724 = vmatprep.subr.bf16.mxu0 %v517
    %725 = vmatpush1.bf16.msra.mxu0 %v516
    %726 = vmatprep.subr.bf16.mxu0 %v515
    %727 = vmatpush1.bf16.msra.mxu0 %v514
    %728 = vmatprep.subr.bf16.mxu0 %v513
    %729 = vmatpush1.bf16.msra.mxu0 %v512
    %730 = vmatprep.subr.bf16.mxu0 %v511
    %731 = vmatpush1.bf16.msra.mxu0 %v510
    %732 = vmatprep.subr.bf16.mxu0 %v509
    %733 = vmatpush1.bf16.msra.mxu0 %v508
    %734 = vmatprep.subr.bf16.mxu0 %v507
    %735 = vmatpush1.bf16.msra.mxu0 %v506
    %736 = vmatprep.subr.bf16.mxu0 %v505
    %737 = vmatpush1.bf16.msra.mxu0 %v504
    %738 = vmatprep.subr.bf16.mxu0 %v535
    %739 = vmatpush2.bf16.msra.mxu0 %v534
    %740 = vmatprep.subr.bf16.mxu0 %v533
    %741 = vmatpush2.bf16.msra.mxu0 %v532
    %742 = vmatprep.subr.bf16.mxu0 %v531
    %743 = vmatpush2.bf16.msra.mxu0 %v530
    %744 = vmatprep.subr.bf16.mxu0 %v529
    %745 = vmatpush2.bf16.msra.mxu0 %v528
    %746 = vmatprep.subr.bf16.mxu0 %v527
    %747 = vmatpush2.bf16.msra.mxu0 %v526
    %748 = vmatprep.subr.bf16.mxu0 %v525
    %749 = vmatpush2.bf16.msra.mxu0 %v524
    %750 = vmatprep.subr.bf16.mxu0 %v523
    %751 = vmatpush2.bf16.msra.mxu0 %v522
    %752 = vmatprep.subr.bf16.mxu0 %v521
    %753 = vmatpush2.bf16.msra.mxu0 %v520
    %754 = vmatprep.mubr.bf16.mxu0 %v34
    %755 = vmatmul.mubr.bf16.gmra.mxu0 %v33
    %v756 = vpop.f32.mrf.mxu0
    %v757 = vadd.f32 %v716, %v756
    %v758 = vpop.f32.mrf.mxu0
    %v759 = vadd.f32 %v718, %v758
    %v760 = vpop.f32.mrf.mxu0
    %v761 = vpop.f32.mrf.mxu0
    %762 = vdwg.mxu0
    %763 = vmatprep.subr.bf16.mxu0 0
    %764 = vmatpush1.bf16.msra.mxu0 0
    %765 = vmatprep.subr.bf16.mxu0 0
    %766 = vmatpush1.bf16.msra.mxu0 0
    %767 = vmatprep.subr.bf16.mxu0 0
    %768 = vmatpush1.bf16.msra.mxu0 0
    %769 = vmatprep.subr.bf16.mxu0 0
    %770 = vmatpush1.bf16.msra.mxu0 0
    %771 = vmatprep.subr.bf16.mxu0 0
    %772 = vmatpush1.bf16.msra.mxu0 0
    %773 = vmatprep.subr.bf16.mxu0 0
    %774 = vmatpush1.bf16.msra.mxu0 0
    %775 = vmatprep.subr.bf16.mxu0 0
    %776 = vmatpush1.bf16.msra.mxu0 0
    %777 = vmatprep.subr.bf16.mxu0 %v537
    %778 = vmatpush1.bf16.msra.mxu0 %v536
    %779 = vmatprep.subr.bf16.mxu0 0
    %780 = vmatpush2.bf16.msra.mxu0 0
    %781 = vmatprep.subr.bf16.mxu0 0
    %782 = vmatpush2.bf16.msra.mxu0 0
    %783 = vmatprep.subr.bf16.mxu0 0
    %784 = vmatpush2.bf16.msra.mxu0 0
    %785 = vmatprep.subr.bf16.mxu0 0
    %786 = vmatpush2.bf16.msra.mxu0 0
    %787 = vmatprep.subr.bf16.mxu0 0
    %788 = vmatpush2.bf16.msra.mxu0 0
    %789 = vmatprep.subr.bf16.mxu0 0
    %790 = vmatpush2.bf16.msra.mxu0 0
    %791 = vmatprep.subr.bf16.mxu0 0
    %792 = vmatpush2.bf16.msra.mxu0 0
    %793 = vmatprep.subr.bf16.mxu0 0
    %794 = vmatpush2.bf16.msra.mxu0 0
    %795 = vmatprep.mubr.bf16.mxu0 0
    %796 = vmatmul.mubr.bf16.gmra.mxu0 %v638
    %v797 = vpop.f32.mrf.mxu0
    %v798 = vadd.f32 %v757, %v797
    %v799 = vpop.f32.mrf.mxu0
    %v800 = vadd.f32 %v759, %v799
    %v801 = vpop.f32.mrf.mxu0
    %v802 = vpop.f32.mrf.mxu0
    %803 = vdwg.mxu0
    %v804 = vpack.c.bf16 %v798, %v798
    %v805 = vpack.c.bf16 %v800, %v800
    %v806 = vld [vmem:[%s3] sm:$0xf]
    %v807 = vld [vmem:[%s3 + $0x4] sm:$0xf]
    %v808 = vld [vmem:[%s3 + $0x8] sm:$0xf]
    %v809 = vld [vmem:[%s3 + $0xc] sm:$0xf]
    %v810 = vld [vmem:[%s3 + $0x10] sm:$0xf]
    %v811 = vld [vmem:[%s3 + $0x14] sm:$0xf]
    %v812 = vld [vmem:[%s3 + $0x18] sm:$0xf]
    %v813 = vld [vmem:[%s3 + $0x1c] sm:$0xf]
    %v814 = vld [vmem:[%s3 + $0x20] sm:$0xf]
    %v815 = vld [vmem:[%s3 + $0x24] sm:$0xf]
    %v816 = vld [vmem:[%s3 + $0x28] sm:$0xf]
    %v817 = vld [vmem:[%s3 + $0x2c] sm:$0xf]
    %v818 = vld [vmem:[%s3 + $0x30] sm:$0xf]
    %v819 = vld [vmem:[%s3 + $0x34] sm:$0xf]
    %v820 = vld [vmem:[%s3 + $0x38] sm:$0xf]
    %v821 = vld [vmem:[%s3 + $0x3c] sm:$0xf]
    %v822 = vld [vmem:[%s3 + $0x40] sm:$0xf]
    %v823 = vld [vmem:[%s3 + $0x44] sm:$0xf]
    %v824 = vld [vmem:[%s3 + $0x48] sm:$0xf]
    %v825 = vld [vmem:[%s3 + $0x4c] sm:$0xf]
    %v826 = vld [vmem:[%s3 + $0x50] sm:$0xf]
    %v827 = vld [vmem:[%s3 + $0x54] sm:$0xf]
    %v828 = vld [vmem:[%s3 + $0x58] sm:$0xf]
    %v829 = vld [vmem:[%s3 + $0x5c] sm:$0xf]
    %v830 = vld [vmem:[%s3 + $0x60] sm:$0xf]
    %v831 = vld [vmem:[%s3 + $0x64] sm:$0xf]
    %v832 = vld [vmem:[%s3 + $0x68] sm:$0xf]
    %v833 = vld [vmem:[%s3 + $0x6c] sm:$0xf]
    %v834 = vld [vmem:[%s3 + $0x70] sm:$0xf]
    %v835 = vld [vmem:[%s3 + $0x74] sm:$0xf]
    %v836 = vld [vmem:[%s3 + $0x78] sm:$0xf]
    %v837 = vld [vmem:[%s3 + $0x7c] sm:$0xf]
    %v838 = vld [vmem:[%s4] sm:$0x1]
    %v840 = vlaneseq
    %v841 = vshrl.u32 %v840, 7
    %v842 = vsub.s32 0, %v841
    %v843 = vrot.slane %v838, %v842
    %v877 = vunpack.c.l.b16 %v806
    %v878 = vunpack.c.l.b16 %v807
    %v879 = vunpack.c.l.b16 %v808
    %v880 = vunpack.c.l.b16 %v809
    %v881 = vunpack.c.l.b16 %v810
    %v882 = vunpack.c.l.b16 %v811
    %v883 = vunpack.c.l.b16 %v812
    %v884 = vunpack.c.l.b16 %v813
    %v885 = vunpack.c.l.b16 %v814
    %v886 = vunpack.c.l.b16 %v815
    %v887 = vunpack.c.l.b16 %v816
    %v888 = vunpack.c.l.b16 %v817
    %v889 = vunpack.c.l.b16 %v818
    %v890 = vunpack.c.l.b16 %v819
    %v891 = vunpack.c.l.b16 %v820
    %v892 = vunpack.c.l.b16 %v821
    %v893 = vunpack.c.l.b16 %v822
    %v894 = vunpack.c.l.b16 %v823
    %v895 = vunpack.c.l.b16 %v824
    %v896 = vunpack.c.l.b16 %v825
    %v897 = vunpack.c.l.b16 %v826
    %v898 = vunpack.c.l.b16 %v827
    %v899 = vunpack.c.l.b16 %v828
    %v900 = vunpack.c.l.b16 %v829
    %v901 = vunpack.c.l.b16 %v830
    %v902 = vunpack.c.l.b16 %v831
    %v903 = vunpack.c.l.b16 %v832
    %v904 = vunpack.c.l.b16 %v833
    %v905 = vunpack.c.l.b16 %v834
    %v906 = vunpack.c.l.b16 %v835
    %v907 = vunpack.c.l.b16 %v836
    %v908 = vunpack.c.l.b16 %v837
    %v909 = vpack.c.b16 %v878, %v877
    %v910 = vpack.c.b16 %v880, %v879
    %v911 = vpack.c.b16 %v882, %v881
    %v912 = vpack.c.b16 %v884, %v883
    %v913 = vpack.c.b16 %v886, %v885
    %v914 = vpack.c.b16 %v888, %v887
    %v915 = vpack.c.b16 %v890, %v889
    %v916 = vpack.c.b16 %v892, %v891
    %v917 = vpack.c.b16 %v894, %v893
    %v918 = vpack.c.b16 %v896, %v895
    %v919 = vpack.c.b16 %v898, %v897
    %v920 = vpack.c.b16 %v900, %v899
    %v921 = vpack.c.b16 %v902, %v901
    %v922 = vpack.c.b16 %v904, %v903
    %v923 = vpack.c.b16 %v906, %v905
    %v924 = vpack.c.b16 %v908, %v907
    %941 = vmatprep.subr.bf16.mxu0 0
    %942 = vmatpush1.bf16.msra.mxu0 %v916
    %943 = vmatprep.subr.bf16.mxu0 0
    %944 = vmatpush1.bf16.msra.mxu0 %v915
    %945 = vmatprep.subr.bf16.mxu0 0
    %946 = vmatpush1.bf16.msra.mxu0 %v914
    %947 = vmatprep.subr.bf16.mxu0 0
    %948 = vmatpush1.bf16.msra.mxu0 %v913
    %949 = vmatprep.subr.bf16.mxu0 0
    %950 = vmatpush1.bf16.msra.mxu0 %v912
    %951 = vmatprep.subr.bf16.mxu0 0
    %952 = vmatpush1.bf16.msra.mxu0 %v911
    %953 = vmatprep.subr.bf16.mxu0 0
    %954 = vmatpush1.bf16.msra.mxu0 %v910
    %955 = vmatprep.subr.bf16.mxu0 0
    %956 = vmatpush1.bf16.msra.mxu0 %v909
    %957 = vmatprep.subr.bf16.mxu0 0
    %958 = vmatpush2.bf16.msra.mxu0 %v924
    %959 = vmatprep.subr.bf16.mxu0 0
    %960 = vmatpush2.bf16.msra.mxu0 %v923
    %961 = vmatprep.subr.bf16.mxu0 0
    %962 = vmatpush2.bf16.msra.mxu0 %v922
    %963 = vmatprep.subr.bf16.mxu0 0
    %964 = vmatpush2.bf16.msra.mxu0 %v921
    %965 = vmatprep.subr.bf16.mxu0 0
    %966 = vmatpush2.bf16.msra.mxu0 %v920
    %967 = vmatprep.subr.bf16.mxu0 0
    %968 = vmatpush2.bf16.msra.mxu0 %v919
    %969 = vmatprep.subr.bf16.mxu0 0
    %970 = vmatpush2.bf16.msra.mxu0 %v918
    %971 = vmatprep.subr.bf16.mxu0 0
    %972 = vmatpush2.bf16.msra.mxu0 %v917
    %973 = vmatprep.mubr.bf16.mxu0 %v805
    %974 = vmatmul.mubr.bf16.gmra.mxu0 %v804
    %v975 = vpop.f32.mrf.mxu0
    %v976 = vadd.f32 %v843, %v975
    %v977 = vpop.f32.mrf.mxu0
    %v978 = vpop.f32.mrf.mxu0
    %v979 = vpop.f32.mrf.mxu0
    %980 = vdwg.mxu0
    %vm981 = vcmask 506880
    %v982 = vsel %vm981, %v976, -inf
    %983 = vmax.xlane.f32.xlu0 %v982
    %v984 = vpop.xlane.xlu0 %983
    %v985 = vsub.f32 %v976, %v984
    %v986 = vmul.f32 %v985, 1.442695
    %v987 = vpow.pop %v986
    %v988 = vsel %vm981, %v987, 0.0
    %989 = vadd.xlane.f32.xlu0 %v988
    %v990 = vpop.xlane.xlu0 %989
    %v991 = vlog2.pop %v990
    %v992 = vmul.f32 %v991, 0.6931472
    %v993 = vadd.f32 %v992, %v984
    %v994 = vsub.f32 %v976, %v993
    %995 = vst.msk [vmem:[#allocation2] sm:$0xff] %vm981, %v994
    // Predicated region
    $region22: #{scafnet_forward.1} parent=1 // pred_check
      _
    $region23: #{scafnet_forward.1} parent=1 // pred_check_branch
      %997 = sbr.rel (0) target = $region25
    $region24: #{scafnet_forward.1} parent=1 // pred_region
      %s999 = ssub.s32 128, 128
      %1000 = vsyncadd [#allocation3], %s999
      %s1002 = sshll.u32 [#allocation2], 4
      %s1003 = int_to_ptr.vmem [resolvable:$true] %s1002
      %1005 = dma.vmem_to_hbm [thread:$0]  %s1003, 128, %s5, [#allocation3]
    $region25: #{scafnet_forward.1} parent=1 // pred_fallthru
      _
    // Predicated region
    $region26: #{scafnet_forward.1} parent=1 // pred_check
      _
    $region27: #{scafnet_forward.1} parent=1 // pred_check_branch
      %1007 = sbr.rel (0) target = $region29
    $region28: #{scafnet_forward.1} parent=1 // pred_region
      %1008 = dma.done [#allocation3], 128
    $region29: #{scafnet_forward.1} parent=1 // pred_fallthru
      _
    %1009 = vsyncpa [#allocation3], 1

</llo_original>
